<compile_context>
chip_gen: v5e
topology: v5e:2x2
jax: 0.10.0
libtpu: 0.0.40
codegen_flags: <defaults>
</compile_context>

<pallas_src>
import functools
import math

import jax
import jax.numpy as jnp
from jax.experimental import pallas as pl
from jax.experimental.pallas import tpu as pltpu

_LN_EPS = 1e-5


def _layernorm_store(y, g_ref, be_ref, o_ref, eps):
    """LayerNorm over the last (lane) dim of f32 `y`, then store."""
    # One-pass stats: mean and mean-of-squares are *independent* cross-lane
    # reductions (they can overlap on the XLU), unlike the serial
    # mean -> (y-mean)^2 -> mean chain.
    mean = jnp.mean(y, axis=-1, keepdims=True)
    mean_sq = jnp.mean(y * y, axis=-1, keepdims=True)
    var = jnp.maximum(mean_sq - mean * mean, 0.0)
    y_hat = (y - mean) * jax.lax.rsqrt(var + eps)
    o_ref[...] = (y_hat * g_ref[...] + be_ref[...]).astype(o_ref.dtype)


def _fused_merge_kernel(x0_ref, x1_ref, w0_ref, w1_ref, b_ref, g_ref, be_ref,
                        o_ref, *, compute_dtype, eps):
    """Fused 2x2 patch-merge + Linear(4C->2C) + LayerNorm(2C).

    x0_ref / x1_ref: (th, w, 2C) -- the s1=0 / s1=1 original image rows of this
      block; the last (lane) dim is the fused (s2, c) channel pair.
    w0_ref / w1_ref: (2C, N) -- the matching row-gathered halves of W^T, so
      y = x0 @ W0 + x1 @ W1 + bias  ==  rearranged_x @ W^T + bias.
    """
    x0 = x0_ref[...]
    x1 = x1_ref[...]
    # Collapse (th, w) -> th*w matmul rows.  The wrapper only takes this path
    # when w % 8 == 0, so this is a pure re-labelling of sublane tiles (the
    # lane dim is untouched) -- no relayout / data movement.
    x0 = x0.reshape(x0.shape[0] * x0.shape[1], x0.shape[2])
    x1 = x1.reshape(x1.shape[0] * x1.shape[1], x1.shape[2])
    w0 = w0_ref[...]
    w1 = w1_ref[...]
    if compute_dtype is not None:          # e.g. bf16 operands on v6e / v7x
        x0 = x0.astype(compute_dtype)
        x1 = x1.astype(compute_dtype)
        w0 = w0.astype(compute_dtype)
        w1 = w1.astype(compute_dtype)
    y = jnp.dot(x0, w0, preferred_element_type=jnp.float32)
    y = y + jnp.dot(x1, w1, preferred_element_type=jnp.float32)
    y = y + b_ref[...]
    _layernorm_store(y, g_ref, be_ref, o_ref, eps)


def _plain_merge_kernel(x_ref, w_ref, b_ref, g_ref, be_ref, o_ref, *,
                        compute_dtype, eps):
    """Linear(4C->2C) + LayerNorm(2C) on an already-rearranged (tm, 4C) tile."""
    xv = x_ref[...]
    wv = w_ref[...]
    if compute_dtype is not None:
        xv = xv.astype(compute_dtype)
        wv = wv.astype(compute_dtype)
    y = jnp.dot(xv, wv, preferred_element_type=jnp.float32)
    y = y + b_ref[...]
    _layernorm_store(y, g_ref, be_ref, o_ref, eps)


def _vmem_plan(rows, k, n, in_isz, out_isz):
    """Rough per-step VMEM bytes: double-buffered tiles + resident weight."""
    return (2 * rows * k * in_isz        # input tile(s), double-buffered
            + 2 * rows * n * out_isz     # output tile, double-buffered
            + 2 * k * n * in_isz         # weight (conservatively x2)
            + rows * n * 4               # f32 matmul / LayerNorm intermediate
            + (2 << 20))                 # params + slack


def patch_merging_forward(x, w, b, gamma, beta, *, tm=1024, compute_dtype=None):
    """PatchMerging forward: (b, h*w, C) -> (b, h/2*w/2, 2C).

    x: (bsz, seq, C) with square, even-sided spatial layout.
    w: (2C, 4C) = nn.Linear(4C, 2C).weight;   b: (2C,) its bias.
    gamma / beta: (2C,) LayerNorm weight / bias.
    tm: target matmul rows per grid step (kept a multiple of 8).
    compute_dtype: optional MXU operand dtype (e.g. jnp.bfloat16 on v6e/v7x);
      accumulation and LayerNorm stay in f32.
    """
    bsz, seq, C = x.shape
    side = int(round(math.sqrt(seq)))
    if side * side != seq or side % 2 != 0:
        raise ValueError(f"seq={seq} must be a perfect square with an even side")
    h = w_dim = side // 2
    K = 4 * C
    N = 2 * C
    eps = _LN_EPS

    w_t = w.T                                  # (4C, N): kernel computes x @ W^T
    b2d = b.reshape(1, N)
    g2d = gamma.reshape(1, N)
    be2d = beta.reshape(1, N)

    in_isz = x.dtype.itemsize
    out_isz = x.dtype.itemsize
    vmem_target = 32 << 20                     # keep well under v7x's 64 MiB VMEM
    vmem_cap = 48 << 20

    if w_dim % 8 == 0:
        # ---------------- Fused-rearrange path ----------------
        # Free reshape (pure contiguous regrouping, no HBM transpose pass):
        #   (bsz, seq, C) -> (bsz*h, s1=2, w, (s2 c)=2C)
        bh = bsz * h
        xa = x.reshape(bh, 2, w_dim, 2 * C)
        # Rearranged channel index is s2*2C + s1*C + c; the fused lane dim of
        # xa is s2*C + c, so gather the matching W^T rows per s1 plane.
        w0 = jnp.concatenate([w_t[0:C], w_t[2 * C:3 * C]], axis=0)      # s1 = 0
        w1 = jnp.concatenate([w_t[C:2 * C], w_t[3 * C:4 * C]], axis=0)  # s1 = 1

        th = max(1, max(8, tm) // w_dim)       # merged-row pairs per grid step
        th = min(th, bh)
        if bh > 1 and pl.cdiv(bh, th) < 2:     # >=2 steps keeps both v7x TCs busy
            th = pl.cdiv(bh, 2)
        while th > 1 and _vmem_plan(th * w_dim, K, N, in_isz, out_isz) > vmem_target:
            th = max(1, th // 2)
        est = _vmem_plan(th * w_dim, K, N, in_isz, out_isz)
        vmem_limit = int(min(max(2 * est, vmem_target), vmem_cap))

        grid = (pl.cdiv(bh, th),)
        # Rows are independent (per-row LayerNorm), so a partial last block is
        # safe: garbage padded rows are masked on the output writeback.
        out2d = pl.pallas_call(
            functools.partial(_fused_merge_kernel,
                              compute_dtype=compute_dtype, eps=eps),
            out_shape=jax.ShapeDtypeStruct((bh * w_dim, N), x.dtype),
            grid_spec=pltpu.PrefetchScalarGridSpec(
                num_scalar_prefetch=0,
                grid=grid,
                in_specs=[
                    # s1 = 0 and s1 = 1 original rows of this block.
                    pl.BlockSpec((th, None, w_dim, 2 * C), lambda i: (i, 0, 0, 0)),
                    pl.BlockSpec((th, None, w_dim, 2 * C), lambda i: (i, 1, 0, 0)),
                    pl.BlockSpec((2 * C, N), lambda i: (0, 0)),
                    pl.BlockSpec((2 * C, N), lambda i: (0, 0)),
                    pl.BlockSpec((1, N), lambda i: (0, 0)),
                    pl.BlockSpec((1, N), lambda i: (0, 0)),
                    pl.BlockSpec((1, N), lambda i: (0, 0)),
                ],
                out_specs=pl.BlockSpec((th * w_dim, N), lambda i: (i, 0)),
            ),
            compiler_params=pltpu.CompilerParams(
                dimension_semantics=("parallel",),
                vmem_limit_bytes=vmem_limit),
        )(xa, xa, w0, w1, b2d, g2d, be2d)
        return out2d.reshape(bsz, h * w_dim, N)

    # ---------------- Fallback path (w % 8 != 0, e.g. w = 28 / 14 / 7) -------
    # Do the einops rearrange as XLA reshape/transpose glue and run the plain
    # fused Linear+LayerNorm kernel on the (M, 4C) slab.
    # TODO(synk): extend the fused path to w % 8 != 0 (needs a non-layout-
    # preserving in-kernel collapse or per-row strided DMA).
    xr = x.reshape(bsz, h, 2, w_dim, 2, C)
    xr = jnp.transpose(xr, (0, 1, 3, 4, 2, 5))          # (b, h, w, s2, s1, c)
    M = bsz * h * w_dim
    x2d = xr.reshape(M, K)

    tmr = min(max(8, tm), M)
    if tmr < M:
        tmr = max(8, (tmr // 8) * 8)                    # multiple of 8
    elif M % 16 == 0:                                   # split single-step grid
        tmr = M // 2                                    # across the 2 v7x TCs
    while tmr > 8 and _vmem_plan(tmr, K, N, in_isz, out_isz) > vmem_target:
        tmr = max(8, (tmr // 2 // 8) * 8)
    est = _vmem_plan(tmr, K, N, in_isz, out_isz)
    vmem_limit = int(min(max(2 * est, vmem_target), vmem_cap))

    grid = (pl.cdiv(M, tmr),)
    out2d = pl.pallas_call(
        functools.partial(_plain_merge_kernel,
                          compute_dtype=compute_dtype, eps=eps),
        out_shape=jax.ShapeDtypeStruct((M, N), x.dtype),
        grid_spec=pltpu.PrefetchScalarGridSpec(
            num_scalar_prefetch=0,
            grid=grid,
            in_specs=[
                pl.BlockSpec((tmr, K), lambda i: (i, 0)),
                pl.BlockSpec((K, N), lambda i: (0, 0)),
                pl.BlockSpec((1, N), lambda i: (0, 0)),
                pl.BlockSpec((1, N), lambda i: (0, 0)),
                pl.BlockSpec((1, N), lambda i: (0, 0)),
            ],
            out_specs=pl.BlockSpec((tmr, N), lambda i: (i, 0)),
        ),
        compiler_params=pltpu.CompilerParams(
            dimension_semantics=("parallel",),
            vmem_limit_bytes=vmem_limit),
    )(x2d, w_t, b2d, g2d, be2d)
    return out2d.reshape(bsz, h * w_dim, N)


def _reference(x, w, b, gamma, beta, eps=_LN_EPS):
    bsz, seq, C = x.shape
    side = int(round(math.sqrt(seq)))
    h = w_dim = side // 2
    xr = x.reshape(bsz, h, 2, w_dim, 2, C)
    xr = jnp.transpose(xr, (0, 1, 3, 4, 2, 5)).reshape(bsz, h * w_dim, 4 * C)
    y = xr @ w.T + b
    mean = jnp.mean(y, axis=-1, keepdims=True)
    var = jnp.mean((y - mean) ** 2, axis=-1, keepdims=True)
    return (y - mean) * jax.lax.rsqrt(var + eps) * gamma + beta


if __name__ == "__main__":
    def make_inputs(key, B, side, C):
        kx, kw, kb, kg, kbe = jax.random.split(key, 5)
        x = jax.random.normal(kx, (B, side * side, C), dtype=jnp.float32)
        w = jax.random.normal(kw, (2 * C, 4 * C), dtype=jnp.float32) / math.sqrt(4 * C)
        b = 0.01 * jax.random.normal(kb, (2 * C,), dtype=jnp.float32)
        gamma = 1.0 + 0.1 * jax.random.normal(kg, (2 * C,), dtype=jnp.float32)
        beta = 0.1 * jax.random.normal(kbe, (2 * C,), dtype=jnp.float32)
        return x, w, b, gamma, beta

    k1, k2 = jax.random.split(jax.random.PRNGKey(0))

    # Case 1: fused-rearrange path (w = side/2 = 8 is a multiple of 8), N = 128
    # so the output store is lane-dense.
    B, side, C = 2, 16, 64
    x, w, b, gamma, beta = make_inputs(k1, B, side, C)
    out = jax.block_until_ready(patch_merging_forward(x, w, b, gamma, beta))
    ref = _reference(x, w, b, gamma, beta)
    assert out.shape == (B, (side // 2) ** 2, 2 * C), out.shape
    assert jnp.allclose(out, ref, atol=5e-4, rtol=5e-4), "fused path mismatch"

    # Case 1b: bf16 MXU operands (v6e/v7x), f32 accumulation + LayerNorm.
    out_bf16 = jax.block_until_ready(
        patch_merging_forward(x, w, b, gamma, beta, compute_dtype=jnp.bfloat16))
    assert jnp.allclose(out_bf16, ref, atol=5e-2, rtol=5e-2), "bf16 path mismatch"

    # Case 2: fallback path (w = 4 not a multiple of 8), small C.
    B2, side2, C2 = 2, 8, 32
    x2, w2, b2, gamma2, beta2 = make_inputs(k2, B2, side2, C2)
    out2 = jax.block_until_ready(patch_merging_forward(x2, w2, b2, gamma2, beta2))
    ref2 = _reference(x2, w2, b2, gamma2, beta2)
    assert out2.shape == (B2, (side2 // 2) ** 2, 2 * C2), out2.shape
    assert jnp.allclose(out2, ref2, atol=5e-4, rtol=5e-4), "fallback path mismatch"

    print("KERNEL_OK")
</pallas_src>

<mosaic_0001>
module attributes {stable_mosaic.version = 11 : i64} {
  func.func @_fused_merge_kernel(%arg0: i32, %arg1: memref<8x1x8x128xf32, #tpu.memory_space<vmem>>, %arg2: memref<8x1x8x128xf32, #tpu.memory_space<vmem>>, %arg3: memref<128x128xf32, #tpu.memory_space<vmem>>, %arg4: memref<128x128xf32, #tpu.memory_space<vmem>>, %arg5: memref<1x128xf32, #tpu.memory_space<vmem>>, %arg6: memref<1x128xf32, #tpu.memory_space<vmem>>, %arg7: memref<1x128xf32, #tpu.memory_space<vmem>>, %arg8: memref<64x128xf32, #tpu.memory_space<vmem>>) attributes {dimension_semantics = [#tpu.dimension_semantics<parallel>], iteration_bounds = array<i64: 2>, scalar_prefetch = 0 : i64, scratch_operands = 0 : i64, tpu.core_type = #tpu.core_type<tc>, window_params = [{transform_indices = @transform_0, window_bounds = array<i64: 8, 1, 8, 128>}, {transform_indices = @transform_1, window_bounds = array<i64: 8, 1, 8, 128>}, {pipeline_mode = #tpu.pipeline_mode<synchronous>, transform_indices = @transform_2, window_bounds = array<i64: 128, 128>}, {pipeline_mode = #tpu.pipeline_mode<synchronous>, transform_indices = @transform_3, window_bounds = array<i64: 128, 128>}, {pipeline_mode = #tpu.pipeline_mode<synchronous>, transform_indices = @transform_4, window_bounds = array<i64: 1, 128>}, {pipeline_mode = #tpu.pipeline_mode<synchronous>, transform_indices = @transform_5, window_bounds = array<i64: 1, 128>}, {pipeline_mode = #tpu.pipeline_mode<synchronous>, transform_indices = @transform_6, window_bounds = array<i64: 1, 128>}, {transform_indices = @transform_7, window_bounds = array<i64: 64, 128>}]} {
    %c0 = arith.constant 0 : index
    %c0_0 = arith.constant 0 : index
    %c0_1 = arith.constant 0 : index
    %c0_2 = arith.constant 0 : index
    %0 = vector.load %arg1[%c0, %c0_0, %c0_1, %c0_2] : memref<8x1x8x128xf32, #tpu.memory_space<vmem>>, vector<8x1x8x128xf32>
    %1 = vector.shape_cast %0 : vector<8x1x8x128xf32> to vector<8x8x128xf32>
    %c0_3 = arith.constant 0 : index
    %c0_4 = arith.constant 0 : index
    %c0_5 = arith.constant 0 : index
    %c0_6 = arith.constant 0 : index
    %2 = vector.load %arg2[%c0_3, %c0_4, %c0_5, %c0_6] : memref<8x1x8x128xf32, #tpu.memory_space<vmem>>, vector<8x1x8x128xf32>
    %3 = vector.shape_cast %2 : vector<8x1x8x128xf32> to vector<8x8x128xf32>
    %4 = vector.shape_cast %1 : vector<8x8x128xf32> to vector<64x128xf32>
    %5 = vector.shape_cast %3 : vector<8x8x128xf32> to vector<64x128xf32>
    %c0_7 = arith.constant 0 : index
    %c0_8 = arith.constant 0 : index
    %6 = vector.load %arg3[%c0_7, %c0_8] : memref<128x128xf32, #tpu.memory_space<vmem>>, vector<128x128xf32>
    %c0_9 = arith.constant 0 : index
    %c0_10 = arith.constant 0 : index
    %7 = vector.load %arg4[%c0_9, %c0_10] : memref<128x128xf32, #tpu.memory_space<vmem>>, vector<128x128xf32>
    %cst = arith.constant dense<0.000000e+00> : vector<64x128xf32>
    %8 = tpu.matmul %4, %6, %cst {dimension_numbers = #tpu.dot_dimension_numbers<[1], [0], [0], [1], [0, 0, 1, 1], [], []>} : vector<64x128xf32>, vector<128x128xf32>, vector<64x128xf32> -> vector<64x128xf32>
    %cst_11 = arith.constant dense<0.000000e+00> : vector<64x128xf32>
    %9 = tpu.matmul %5, %7, %cst_11 {dimension_numbers = #tpu.dot_dimension_numbers<[1], [0], [0], [1], [0, 0, 1, 1], [], []>} : vector<64x128xf32>, vector<128x128xf32>, vector<64x128xf32> -> vector<64x128xf32>
    %10 = arith.addf %8, %9 : vector<64x128xf32>
    %c0_12 = arith.constant 0 : index
    %c0_13 = arith.constant 0 : index
    %11 = vector.load %arg5[%c0_12, %c0_13] : memref<1x128xf32, #tpu.memory_space<vmem>>, vector<1x128xf32>
    %12 = vector.broadcast %11 : vector<1x128xf32> to vector<64x128xf32>
    %13 = arith.addf %10, %12 : vector<64x128xf32>
    %cst_14 = arith.constant dense<0.000000e+00> : vector<64xf32>
    %14 = vector.multi_reduction <add>, %13, %cst_14 [1] : vector<64x128xf32> to vector<64xf32>
    %15 = vector.shape_cast %14 : vector<64xf32> to vector<64x1xf32>
    %cst_15 = arith.constant 1.280000e+02 : f32
    %16 = vector.broadcast %cst_15 : f32 to vector<64x1xf32>
    %17 = arith.divf %15, %16 : vector<64x1xf32>
    %18 = arith.mulf %13, %13 : vector<64x128xf32>
    %cst_16 = arith.constant dense<0.000000e+00> : vector<64xf32>
    %19 = vector.multi_reduction <add>, %18, %cst_16 [1] : vector<64x128xf32> to vector<64xf32>
    %20 = vector.shape_cast %19 : vector<64xf32> to vector<64x1xf32>
    %cst_17 = arith.constant 1.280000e+02 : f32
    %21 = vector.broadcast %cst_17 : f32 to vector<64x1xf32>
    %22 = arith.divf %20, %21 : vector<64x1xf32>
    %23 = arith.mulf %17, %17 : vector<64x1xf32>
    %24 = arith.subf %22, %23 : vector<64x1xf32>
    %cst_18 = arith.constant 0.000000e+00 : f32
    %25 = vector.broadcast %cst_18 : f32 to vector<64x1xf32>
    %26 = arith.maximumf %24, %25 : vector<64x1xf32>
    %27 = vector.broadcast %17 : vector<64x1xf32> to vector<64x128xf32>
    %28 = arith.subf %13, %27 : vector<64x128xf32>
    %cst_19 = arith.constant 9.99999974E-6 : f32
    %29 = vector.broadcast %cst_19 : f32 to vector<64x1xf32>
    %30 = arith.addf %26, %29 : vector<64x1xf32>
    %31 = math.rsqrt %30 : vector<64x1xf32>
    %32 = vector.broadcast %31 : vector<64x1xf32> to vector<64x128xf32>
    %33 = arith.mulf %28, %32 : vector<64x128xf32>
    %c0_20 = arith.constant 0 : index
    %c0_21 = arith.constant 0 : index
    %34 = vector.load %arg6[%c0_20, %c0_21] : memref<1x128xf32, #tpu.memory_space<vmem>>, vector<1x128xf32>
    %35 = vector.broadcast %34 : vector<1x128xf32> to vector<64x128xf32>
    %36 = arith.mulf %33, %35 : vector<64x128xf32>
    %c0_22 = arith.constant 0 : index
    %c0_23 = arith.constant 0 : index
    %37 = vector.load %arg7[%c0_22, %c0_23] : memref<1x128xf32, #tpu.memory_space<vmem>>, vector<1x128xf32>
    %38 = vector.broadcast %37 : vector<1x128xf32> to vector<64x128xf32>
    %39 = arith.addf %36, %38 : vector<64x128xf32>
    %c0_24 = arith.constant 0 : index
    %c0_25 = arith.constant 0 : index
    %40 = vector.load %arg8[%c0_24, %c0_25] : memref<64x128xf32, #tpu.memory_space<vmem>>, vector<64x128xf32>
    tpu.vector_store %arg8[%c0_24, %c0_25], %39 {strides = array<i32>} : memref<64x128xf32, #tpu.memory_space<vmem>>, vector<64x128xf32>,
    return
  }
  func.func @transform_0(%arg0: i32) -> (i32, i32, i32, i32) {
    %c0_i32 = arith.constant 0 : i32
    %c0_i32_0 = arith.constant 0 : i32
    %c0_i32_1 = arith.constant 0 : i32
    %c0_i32_2 = arith.constant 0 : i32
    return %arg0, %c0_i32, %c0_i32_0, %c0_i32_1 : i32, i32, i32, i32
  }
  func.func @transform_1(%arg0: i32) -> (i32, i32, i32, i32) {
    %c1_i32 = arith.constant 1 : i32
    %c0_i32 = arith.constant 0 : i32
    %c0_i32_0 = arith.constant 0 : i32
    %c0_i32_1 = arith.constant 0 : i32
    return %arg0, %c1_i32, %c0_i32, %c0_i32_0 : i32, i32, i32, i32
  }
  func.func @transform_2(%arg0: i32) -> (i32, i32) {
    %c0_i32 = arith.constant 0 : i32
    %c0_i32_0 = arith.constant 0 : i32
    %c0_i32_1 = arith.constant 0 : i32
    return %c0_i32, %c0_i32_0 : i32, i32
  }
  func.func @transform_3(%arg0: i32) -> (i32, i32) {
    %c0_i32 = arith.constant 0 : i32
    %c0_i32_0 = arith.constant 0 : i32
    %c0_i32_1 = arith.constant 0 : i32
    return %c0_i32, %c0_i32_0 : i32, i32
  }
  func.func @transform_4(%arg0: i32) -> (i32, i32) {
    %c0_i32 = arith.constant 0 : i32
    %c0_i32_0 = arith.constant 0 : i32
    %c0_i32_1 = arith.constant 0 : i32
    return %c0_i32, %c0_i32_0 : i32, i32
  }
  func.func @transform_5(%arg0: i32) -> (i32, i32) {
    %c0_i32 = arith.constant 0 : i32
    %c0_i32_0 = arith.constant 0 : i32
    %c0_i32_1 = arith.constant 0 : i32
    return %c0_i32, %c0_i32_0 : i32, i32
  }
  func.func @transform_6(%arg0: i32) -> (i32, i32) {
    %c0_i32 = arith.constant 0 : i32
    %c0_i32_0 = arith.constant 0 : i32
    %c0_i32_1 = arith.constant 0 : i32
    return %c0_i32, %c0_i32_0 : i32, i32
  }
  func.func @transform_7(%arg0: i32) -> (i32, i32) {
    %c0_i32 = arith.constant 0 : i32
    %c0_i32_0 = arith.constant 0 : i32
    return %arg0, %c0_i32 : i32, i32
  }
}

</mosaic_0001>

<llo_original>
// kernel: tpu_custom_call.1
$region0: #{tpu_custom_call.1}
  #allocation0 [shape = 'u32[]', space=smem, size = 0x4, offset = 0x4, fixed_abs, tag = 'smem constant byte address 0x4 - core index']
  #allocation1 [shape = 'u32[72,128]{1,0:T(1,128)}', space=vmem, size = 0x9000, scoped, tag = 'internal scratch']
  %s0 = inlined_call_operand.hbm [shape: f32[16,2,8,128], index: 0, kind: input, shape index: {}]
  %s1 = inlined_call_operand.hbm [shape: f32[16,2,8,128], index: 1, kind: input, shape index: {}]
  %s2 = inlined_call_operand.hbm [shape: f32[128,128], index: 2, kind: input, shape index: {}]
  %s3 = inlined_call_operand.hbm [shape: f32[128,128], index: 3, kind: input, shape index: {}]
  %s4 = inlined_call_operand.vmem [shape: f32[1,128], index: 4, kind: input, shape index: {}]
  %s5 = inlined_call_operand.vmem [shape: f32[1,128], index: 5, kind: input, shape index: {}]
  %s6 = inlined_call_operand.vmem [shape: f32[1,128], index: 6, kind: input, shape index: {}]
  %s7 = inlined_call_operand.hbm [shape: f32[128,128], index: 7, kind: output, shape index: {}]
  %s8 = sld [smem:[#allocation0]]
  $region77: #{tpu_custom_call.1} parent=0
    _
  %s10 = ssub.s32 1, %s8
  %s11 = scalar_select 0, %s10, %s8
  $region1: #{tpu_custom_call.1} parent=0
    #allocation2 [shape = 'u8[65536]{0}', space=vmem, size = 0x10000, scoped, tag = 'input window, operand 0']
    #allocation3 [shape = 's32[2]{0}', space=sflag, size = 0x8, scoped, tag = 'scoped memory for tpu_custom_call.1']
    #allocation4 [shape = 's32[2]{0}', space=sflag, size = 0x8, scoped, tag = 'scoped memory for tpu_custom_call.1']
    #allocation5 [shape = 'u8[65536]{0}', space=vmem, size = 0x10000, scoped, tag = 'input window, operand 1']
    #allocation6 [shape = 's32[2]{0}', space=sflag, size = 0x8, scoped, tag = 'scoped memory for tpu_custom_call.1']
    #allocation7 [shape = 'u8[65536]{0}', space=vmem, size = 0x10000, scoped, tag = 'input window, operand 2, single buffered']
    #allocation8 [shape = 'u8[65536]{0}', space=vmem, size = 0x10000, scoped, tag = 'input window, operand 3, single buffered']
    #allocation9 [shape = 's32[1]{0}', space=sflag, size = 0x4, scoped, tag = 'scoped memory for tpu_custom_call.1']
    #allocation10 [shape = 'u8[65536]{0}', space=vmem, size = 0x10000, scoped, tag = 'output window, operand 0']
    %12 = vsyncpa [#allocation3], 0
    %s13 = scalar_lea.sflag [#allocation3], 1
    %14 = vsyncpa %s13, 0
    %15 = vsyncpa [#allocation6], 0
    %s16 = scalar_lea.sflag [#allocation6], 1
    %17 = vsyncpa %s16, 0
    %18 = vsyncpa [#allocation9], 0
    %19 = vsyncpa [#allocation4], 0
    %s20 = scalar_lea.sflag [#allocation4], 1
    %21 = vsyncpa %s20, 0
    loop: start=0, step=1, limit=4
    $region2: #{tpu_custom_call.1} parent=1 // loop_pre_header
      _
    $region3: #{tpu_custom_call.1} parent=1 // loop_header
      %s23 = sphi 0, %s27
      %p24 = scmp.ge.s32.totalorder %s23, 4
      %s33 = sphi 0, %s35
      %s36 = sphi 0, %s33
      %s37 = sphi 0, %s36
      %s53 = sphi 0, %s37
      %s59 = sphi 0, %s61
      %s62 = sphi 0, %s59
      %s63 = sphi 0, %s62
      %s79 = sphi 0, %s63
      %s83 = sphi 0, %s83
      %s85 = sphi 0, %s83
      %s86 = sphi 0, %s85
      %s100 = sphi 0, %s86
      %s104 = sphi 0, %s104
      %s106 = sphi 0, %s104
      %s107 = sphi 0, %s106
      %s121 = sphi 0, %s107
      %s125 = sphi 0, %s125
      %s127 = sphi 0, %s125
      %s128 = sphi 0, %s127
      %s142 = sphi 0, %s128
      %s146 = sphi 0, %s146
      %s148 = sphi 0, %s146
      %s149 = sphi 0, %s148
      %s163 = sphi 0, %s149
      %s167 = sphi 0, %s167
      %s169 = sphi 0, %s167
      %s170 = sphi 0, %s169
      %s184 = sphi 0, %s170
      %s190 = sphi 0, %s192
      %s193 = sphi 0, %s190
      %s194 = sphi 0, %s193
      %s210 = sphi 0, %s194
    $region4: #{tpu_custom_call.1} parent=1 // loop_header_branch
      %26 = sbr.rel (%p24) target = $region8
    $region5: #{tpu_custom_call.1} parent=1 // loop_body
      %s28 = ssub.s32 %s23, 1
      %s29 = ssub.s32 %s23, 2
      %s30 = sadd.s32 %s23, 1
      %s31 = ssub.s32 %s23, %s30
      %p32 = scmp.eq.s32.totalorder %s31, 0
      %s34 = sadd.s32 %s33, 1
      %s35 = scalar_select %p32, %s33, %s34
      %p38 = pneg %p32
      %p39 = scmp.eq.s32.totalorder %s23, 1
      %p40 = por %p38, %p39
      %p41 = scmp.ne.s32.totalorder %s33, %s36
      %p42 = scmp.eq.s32.totalorder %s23, 0
      %p43 = por %p41, %p42
      %p44 = scmp.ne.s32.totalorder %s33, %s36
      %p45 = scmp.eq.s32.totalorder %s28, 1
      %p46 = por %p44, %p45
      %p47 = scmp.ne.s32.totalorder %s36, %s37
      %p48 = scmp.eq.s32.totalorder %s28, 0
      %p49 = por %p47, %p48
      %p50 = scmp.ne.s32.totalorder %s36, %s37
      %p51 = scmp.eq.s32.totalorder %s29, 1
      %p52 = por %p50, %p51
      %p54 = scmp.ne.s32.totalorder %s37, %s53
      %p55 = scmp.eq.s32.totalorder %s29, 0
      %p56 = por %p54, %p55
      %s57 = ssub.s32 %s23, %s30
      %p58 = scmp.eq.s32.totalorder %s57, 0
      %s60 = sadd.s32 %s59, 1
      %s61 = scalar_select %p58, %s59, %s60
      %p64 = pneg %p58
      %p65 = scmp.eq.s32.totalorder %s23, 1
      %p66 = por %p64, %p65
      %p67 = scmp.ne.s32.totalorder %s59, %s62
      %p68 = scmp.eq.s32.totalorder %s23, 0
      %p69 = por %p67, %p68
      %p70 = scmp.ne.s32.totalorder %s59, %s62
      %p71 = scmp.eq.s32.totalorder %s28, 1
      %p72 = por %p70, %p71
      %p73 = scmp.ne.s32.totalorder %s62, %s63
      %p74 = scmp.eq.s32.totalorder %s28, 0
      %p75 = por %p73, %p74
      %p76 = scmp.ne.s32.totalorder %s62, %s63
      %p77 = scmp.eq.s32.totalorder %s29, 1
      %p78 = por %p76, %p77
      %p80 = scmp.ne.s32.totalorder %s63, %s79
      %p81 = scmp.eq.s32.totalorder %s29, 0
      %p82 = por %p80, %p81
      %s84 = sadd.s32 %s83, 1
      %p87 = scmp.eq.s32.totalorder %s23, 1
      %p88 = scmp.ne.s32.totalorder %s83, %s85
      %p89 = scmp.eq.s32.totalorder %s23, 0
      %p90 = por %p88, %p89
      %p91 = scmp.ne.s32.totalorder %s83, %s85
      %p92 = scmp.eq.s32.totalorder %s28, 1
      %p93 = por %p91, %p92
      %p94 = scmp.ne.s32.totalorder %s85, %s86
      %p95 = scmp.eq.s32.totalorder %s28, 0
      %p96 = por %p94, %p95
      %p97 = scmp.ne.s32.totalorder %s85, %s86
      %p98 = scmp.eq.s32.totalorder %s29, 1
      %p99 = por %p97, %p98
      %p101 = scmp.ne.s32.totalorder %s86, %s100
      %p102 = scmp.eq.s32.totalorder %s29, 0
      %p103 = por %p101, %p102
      %s105 = sadd.s32 %s104, 1
      %p108 = scmp.eq.s32.totalorder %s23, 1
      %p109 = scmp.ne.s32.totalorder %s104, %s106
      %p110 = scmp.eq.s32.totalorder %s23, 0
      %p111 = por %p109, %p110
      %p112 = scmp.ne.s32.totalorder %s104, %s106
      %p113 = scmp.eq.s32.totalorder %s28, 1
      %p114 = por %p112, %p113
      %p115 = scmp.ne.s32.totalorder %s106, %s107
      %p116 = scmp.eq.s32.totalorder %s28, 0
      %p117 = por %p115, %p116
      %p118 = scmp.ne.s32.totalorder %s106, %s107
      %p119 = scmp.eq.s32.totalorder %s29, 1
      %p120 = por %p118, %p119
      %p122 = scmp.ne.s32.totalorder %s107, %s121
      %p123 = scmp.eq.s32.totalorder %s29, 0
      %p124 = por %p122, %p123
      %s126 = sadd.s32 %s125, 1
      %p129 = scmp.eq.s32.totalorder %s23, 1
      %p130 = scmp.ne.s32.totalorder %s125, %s127
      %p131 = scmp.eq.s32.totalorder %s23, 0
      %p132 = por %p130, %p131
      %p133 = scmp.ne.s32.totalorder %s125, %s127
      %p134 = scmp.eq.s32.totalorder %s28, 1
      %p135 = por %p133, %p134
      %p136 = scmp.ne.s32.totalorder %s127, %s128
      %p137 = scmp.eq.s32.totalorder %s28, 0
      %p138 = por %p136, %p137
      %p139 = scmp.ne.s32.totalorder %s127, %s128
      %p140 = scmp.eq.s32.totalorder %s29, 1
      %p141 = por %p139, %p140
      %p143 = scmp.ne.s32.totalorder %s128, %s142
      %p144 = scmp.eq.s32.totalorder %s29, 0
      %p145 = por %p143, %p144
      %s147 = sadd.s32 %s146, 1
      %p150 = scmp.eq.s32.totalorder %s23, 1
      %p151 = scmp.ne.s32.totalorder %s146, %s148
      %p152 = scmp.eq.s32.totalorder %s23, 0
      %p153 = por %p151, %p152
      %p154 = scmp.ne.s32.totalorder %s146, %s148
      %p155 = scmp.eq.s32.totalorder %s28, 1
      %p156 = por %p154, %p155
      %p157 = scmp.ne.s32.totalorder %s148, %s149
      %p158 = scmp.eq.s32.totalorder %s28, 0
      %p159 = por %p157, %p158
      %p160 = scmp.ne.s32.totalorder %s148, %s149
      %p161 = scmp.eq.s32.totalorder %s29, 1
      %p162 = por %p160, %p161
      %p164 = scmp.ne.s32.totalorder %s149, %s163
      %p165 = scmp.eq.s32.totalorder %s29, 0
      %p166 = por %p164, %p165
      %s168 = sadd.s32 %s167, 1
      %p171 = scmp.eq.s32.totalorder %s23, 1
      %p172 = scmp.ne.s32.totalorder %s167, %s169
      %p173 = scmp.eq.s32.totalorder %s23, 0
      %p174 = por %p172, %p173
      %p175 = scmp.ne.s32.totalorder %s167, %s169
      %p176 = scmp.eq.s32.totalorder %s28, 1
      %p177 = por %p175, %p176
      %p178 = scmp.ne.s32.totalorder %s169, %s170
      %p179 = scmp.eq.s32.totalorder %s28, 0
      %p180 = por %p178, %p179
      %p181 = scmp.ne.s32.totalorder %s169, %s170
      %p182 = scmp.eq.s32.totalorder %s29, 1
      %p183 = por %p181, %p182
      %p185 = scmp.ne.s32.totalorder %s170, %s184
      %p186 = scmp.eq.s32.totalorder %s29, 0
      %p187 = por %p185, %p186
      %s188 = ssub.s32 %s23, %s30
      %p189 = scmp.eq.s32.totalorder %s188, 0
      %s191 = sadd.s32 %s190, 1
      %s192 = scalar_select %p189, %s190, %s191
      %p195 = pneg %p189
      %p196 = scmp.eq.s32.totalorder %s23, 1
      %p197 = por %p195, %p196
      %p198 = scmp.ne.s32.totalorder %s190, %s193
      %p199 = scmp.eq.s32.totalorder %s23, 0
      %p200 = por %p198, %p199
      %p201 = scmp.ne.s32.totalorder %s190, %s193
      %p202 = scmp.eq.s32.totalorder %s28, 1
      %p203 = por %p201, %p202
      %p204 = scmp.ne.s32.totalorder %s193, %s194
      %p205 = scmp.eq.s32.totalorder %s28, 0
      %p206 = por %p204, %p205
      %p207 = scmp.ne.s32.totalorder %s193, %s194
      %p208 = scmp.eq.s32.totalorder %s29, 1
      %p209 = por %p207, %p208
      %p211 = scmp.ne.s32.totalorder %s194, %s210
      %p212 = scmp.eq.s32.totalorder %s29, 0
      %p213 = por %p211, %p212
      %p214 = scmp.le.s32.totalorder 1, %s23
      %p215 = scmp.lt.s32.totalorder %s23, 3
      %p216 = pnand %p214, %p215
      %p217 = pneg %p216
      // Predicated region
      $region9: #{tpu_custom_call.1} parent=5 // pred_check
        _
      $region10: #{tpu_custom_call.1} parent=5 // pred_check_branch
        %219 = sbr.rel (%p216) target = $region12
      $region11: #{tpu_custom_call.1} parent=5 // pred_region
        %s220 = ssub.s32 %s23, 1
        // Predicated region
        $region13: #{tpu_custom_call.1} parent=11 // pred_check
          %p221 = pneg %p96
        $region14: #{tpu_custom_call.1} parent=11 // pred_check_branch
          %223 = sbr.rel (%p221) target = $region16
        $region15: #{tpu_custom_call.1} parent=11 // pred_region
          %225 = vsyncadd [#allocation6], 0
          %s226 = sshll.u32 %s2, 4
          %s227 = int_to_ptr.hbm [resolvable:$true] %s226
          %s228 = sshll.u32 [#allocation7], 4
          %s229 = int_to_ptr.vmem [resolvable:$true] %s228
          %234 = dma.hbm_to_vmem [thread:$0]  %s227, 2048, %s229, [#allocation6], 128, 128, 8
        $region16: #{tpu_custom_call.1} parent=11 // pred_fallthru
          _
        // Predicated region
        $region17: #{tpu_custom_call.1} parent=11 // pred_check
          %p235 = pneg %p117
        $region18: #{tpu_custom_call.1} parent=11 // pred_check_branch
          %237 = sbr.rel (%p235) target = $region20
        $region19: #{tpu_custom_call.1} parent=11 // pred_region
          %239 = vsyncadd [#allocation9], 0
          %s240 = sshll.u32 %s3, 4
          %s241 = int_to_ptr.hbm [resolvable:$true] %s240
          %s242 = sshll.u32 [#allocation8], 4
          %s243 = int_to_ptr.vmem [resolvable:$true] %s242
          %248 = dma.hbm_to_vmem [thread:$0]  %s241, 2048, %s243, [#allocation9], 128, 128, 8
        $region20: #{tpu_custom_call.1} parent=11 // pred_fallthru
          _
        // Predicated region
        $region21: #{tpu_custom_call.1} parent=11 // pred_check
          %p249 = pneg %p138
        $region22: #{tpu_custom_call.1} parent=11 // pred_check_branch
          %251 = sbr.rel (%p249) target = $region24
        $region23: #{tpu_custom_call.1} parent=11 // pred_region
          _
        $region24: #{tpu_custom_call.1} parent=11 // pred_fallthru
          _
        // Predicated region
        $region25: #{tpu_custom_call.1} parent=11 // pred_check
          %p252 = pneg %p159
        $region26: #{tpu_custom_call.1} parent=11 // pred_check_branch
          %254 = sbr.rel (%p252) target = $region28
        $region27: #{tpu_custom_call.1} parent=11 // pred_region
          _
        $region28: #{tpu_custom_call.1} parent=11 // pred_fallthru
          _
        // Predicated region
        $region29: #{tpu_custom_call.1} parent=11 // pred_check
          %p255 = pneg %p180
        $region30: #{tpu_custom_call.1} parent=11 // pred_check_branch
          %257 = sbr.rel (%p255) target = $region32
        $region31: #{tpu_custom_call.1} parent=11 // pred_region
          _
        $region32: #{tpu_custom_call.1} parent=11 // pred_fallthru
          _
      $region12: #{tpu_custom_call.1} parent=5 // pred_fallthru
        _
      %p258 = scmp.lt.s32.totalorder %s23, 2
      // Predicated region
      $region33: #{tpu_custom_call.1} parent=5 // pred_check
        %p259 = pneg %p258
      $region34: #{tpu_custom_call.1} parent=5 // pred_check_branch
        %261 = sbr.rel (%p259) target = $region36
      $region35: #{tpu_custom_call.1} parent=5 // pred_region
        // Predicated region
        $region37: #{tpu_custom_call.1} parent=35 // pred_check
          %p262 = pneg %p43
        $region38: #{tpu_custom_call.1} parent=35 // pred_check_branch
          %264 = sbr.rel (%p262) target = $region40
        $region39: #{tpu_custom_call.1} parent=35 // pred_region
          %s265 = sand.u32 %s33, 1
          %s266 = scalar_lea.sflag [#allocation3], %s265
          %s267 = sand.u32 %s33, 1
          %s268 = smul.addr %s267, 64
          %s269 = scalar_lea.vmem [#allocation2], %s268
          %s270 = smul.u32 8, %s23
          %272 = vsyncadd %s266, 0
          %s273 = smul.addr %s270, 2
          %s274 = smul.addr %s273, 8
          %s275 = scalar_lea.hbm %s0, %s274
          %s276 = sshll.u32 %s275, 4
          %s277 = int_to_ptr.hbm [resolvable:$true] %s276
          %s278 = sshll.u32 %s269, 4
          %s279 = int_to_ptr.vmem [resolvable:$true] %s278
          %284 = dma.hbm_to_vmem [thread:$0]  %s277, 1024, %s279, %s266, 256, 128, 8
        $region40: #{tpu_custom_call.1} parent=35 // pred_fallthru
          _
        // Predicated region
        $region41: #{tpu_custom_call.1} parent=35 // pred_check
          %p285 = pneg %p69
        $region42: #{tpu_custom_call.1} parent=35 // pred_check_branch
          %287 = sbr.rel (%p285) target = $region44
        $region43: #{tpu_custom_call.1} parent=35 // pred_region
          %s288 = sand.u32 %s23, 1
          %s289 = scalar_lea.sflag [#allocation6], %s288
          %s290 = sand.u32 %s59, 1
          %s291 = smul.addr %s290, 64
          %s292 = scalar_lea.vmem [#allocation5], %s291
          %s293 = smul.u32 8, %s23
          %295 = vsyncadd %s289, 0
          %s296 = smul.addr %s293, 2
          %s297 = sadd.s32 1, %s296
          %s298 = smul.addr %s297, 8
          %s299 = scalar_lea.hbm %s1, %s298
          %s300 = sshll.u32 %s299, 4
          %s301 = int_to_ptr.hbm [resolvable:$true] %s300
          %s302 = sshll.u32 %s292, 4
          %s303 = int_to_ptr.vmem [resolvable:$true] %s302
          %308 = dma.hbm_to_vmem [thread:$0]  %s301, 1024, %s303, %s289, 256, 128, 8
        $region44: #{tpu_custom_call.1} parent=35 // pred_fallthru
          _
      $region36: #{tpu_custom_call.1} parent=5 // pred_fallthru
        _
      %p309 = scmp.le.s32.totalorder 1, %s23
      %p310 = scmp.lt.s32.totalorder %s23, 3
      %p311 = pnand %p309, %p310
      %p312 = pneg %p311
      // Predicated region
      $region45: #{tpu_custom_call.1} parent=5 // pred_check
        _
      $region46: #{tpu_custom_call.1} parent=5 // pred_check_branch
        %314 = sbr.rel (%p311) target = $region48
      $region47: #{tpu_custom_call.1} parent=5 // pred_region
        %s315 = ssub.s32 %s23, 1
        %s316 = sand.u32 %s36, 1
        %s317 = scalar_lea.sflag [#allocation3], %s316
        %s318 = sand.u32 %s36, 1
        %s319 = smul.addr %s318, 64
        %s320 = scalar_lea.vmem [#allocation2], %s319
        // Predicated region
        $region49: #{tpu_custom_call.1} parent=47 // pred_check
          %p321 = pneg %p49
        $region50: #{tpu_custom_call.1} parent=47 // pred_check_branch
          %323 = sbr.rel (%p321) target = $region52
        $region51: #{tpu_custom_call.1} parent=47 // pred_region
          %325 = dma.done %s317, 1024
        $region52: #{tpu_custom_call.1} parent=47 // pred_fallthru
          _
        %s326 = sand.u32 %s28, 1
        %s327 = scalar_lea.sflag [#allocation6], %s326
        %s328 = sand.u32 %s62, 1
        %s329 = smul.addr %s328, 64
        %s330 = scalar_lea.vmem [#allocation5], %s329
        // Predicated region
        $region53: #{tpu_custom_call.1} parent=47 // pred_check
          %p331 = pneg %p75
        $region54: #{tpu_custom_call.1} parent=47 // pred_check_branch
          %333 = sbr.rel (%p331) target = $region56
        $region55: #{tpu_custom_call.1} parent=47 // pred_region
          %335 = dma.done %s327, 1024
        $region56: #{tpu_custom_call.1} parent=47 // pred_fallthru
          _
        // Predicated region
        $region57: #{tpu_custom_call.1} parent=47 // pred_check
          %p336 = pneg %p96
        $region58: #{tpu_custom_call.1} parent=47 // pred_check_branch
          %338 = sbr.rel (%p336) target = $region60
        $region59: #{tpu_custom_call.1} parent=47 // pred_region
          %340 = dma.done [#allocation6], 2048
        $region60: #{tpu_custom_call.1} parent=47 // pred_fallthru
          _
        // Predicated region
        $region61: #{tpu_custom_call.1} parent=47 // pred_check
          %p341 = pneg %p117
        $region62: #{tpu_custom_call.1} parent=47 // pred_check_branch
          %343 = sbr.rel (%p341) target = $region64
        $region63: #{tpu_custom_call.1} parent=47 // pred_region
          %345 = dma.done [#allocation9], 2048
        $region64: #{tpu_custom_call.1} parent=47 // pred_fallthru
          _
        %s346 = sand.u32 %s36, 1
        %s347 = scalar_lea.sflag [#allocation3], %s346
        %s348 = sand.u32 %s36, 1
        %s349 = smul.addr %s348, 64
        %s350 = scalar_lea.vmem [#allocation2], %s349
        %p351 = pneg %p49
        %p352 = pneg %p46
        %s353 = sand.u32 %s28, 1
        %s354 = scalar_lea.sflag [#allocation6], %s353
        %s355 = sand.u32 %s62, 1
        %s356 = smul.addr %s355, 64
        %s357 = scalar_lea.vmem [#allocation5], %s356
        %p358 = pneg %p75
        %p359 = pneg %p72
        %p360 = pneg %p96
        %p361 = pneg %p93
        %p362 = pneg %p117
        %p363 = pneg %p114
        %p364 = pneg %p138
        %p365 = pneg %p135
        %p366 = pneg %p159
        %p367 = pneg %p156
        %p368 = pneg %p180
        %p369 = pneg %p177
        %p370 = pneg %p206
        %p371 = pneg %p203
        %s372 = sand.u32 %s193, 1
        %s373 = scalar_lea.sflag [#allocation4], %s372
        %s374 = sand.u32 %s193, 1
        %s375 = smul.addr %s374, 64
        %s376 = scalar_lea.vmem [#allocation10], %s375
        %s377 = smul.u32 8, %s28
        %s378 = smul.u32 8, %s28
        %s379 = smul.u32 8, %s28
        %v380 = vld [vmem:[%s320] sm:$0xff]
        %v381 = vld [vmem:[%s320 + $0x8] sm:$0xff]
        %v382 = vld [vmem:[%s320 + $0x10] sm:$0xff]
        %v383 = vld [vmem:[%s320 + $0x18] sm:$0xff]
        %v384 = vld [vmem:[%s320 + $0x20] sm:$0xff]
        %v385 = vld [vmem:[%s320 + $0x28] sm:$0xff]
        %v386 = vld [vmem:[%s320 + $0x30] sm:$0xff]
        %v387 = vld [vmem:[%s320 + $0x38] sm:$0xff]
        %v388 = vld [vmem:[%s330] sm:$0xff]
        %v389 = vld [vmem:[%s330 + $0x8] sm:$0xff]
        %v390 = vld [vmem:[%s330 + $0x10] sm:$0xff]
        %v391 = vld [vmem:[%s330 + $0x18] sm:$0xff]
        %v392 = vld [vmem:[%s330 + $0x20] sm:$0xff]
        %v393 = vld [vmem:[%s330 + $0x28] sm:$0xff]
        %v394 = vld [vmem:[%s330 + $0x30] sm:$0xff]
        %v395 = vld [vmem:[%s330 + $0x38] sm:$0xff]
        %v396 = vld [vmem:[#allocation7] sm:$0xff]
        %v397 = vld [vmem:[#allocation7 + $0x8] sm:$0xff]
        %v398 = vld [vmem:[#allocation7 + $0x10] sm:$0xff]
        %v399 = vld [vmem:[#allocation7 + $0x18] sm:$0xff]
        %v400 = vld [vmem:[#allocation7 + $0x20] sm:$0xff]
        %v401 = vld [vmem:[#allocation7 + $0x28] sm:$0xff]
        %v402 = vld [vmem:[#allocation7 + $0x30] sm:$0xff]
        %v403 = vld [vmem:[#allocation7 + $0x38] sm:$0xff]
        %v404 = vld [vmem:[#allocation7 + $0x40] sm:$0xff]
        %v405 = vld [vmem:[#allocation7 + $0x48] sm:$0xff]
        %v406 = vld [vmem:[#allocation7 + $0x50] sm:$0xff]
        %v407 = vld [vmem:[#allocation7 + $0x58] sm:$0xff]
        %v408 = vld [vmem:[#allocation7 + $0x60] sm:$0xff]
        %v409 = vld [vmem:[#allocation7 + $0x68] sm:$0xff]
        %v410 = vld [vmem:[#allocation7 + $0x70] sm:$0xff]
        %v411 = vld [vmem:[#allocation7 + $0x78] sm:$0xff]
        %v412 = vld [vmem:[#allocation8] sm:$0xff]
        %v413 = vld [vmem:[#allocation8 + $0x8] sm:$0xff]
        %v414 = vld [vmem:[#allocation8 + $0x10] sm:$0xff]
        %v415 = vld [vmem:[#allocation8 + $0x18] sm:$0xff]
        %v416 = vld [vmem:[#allocation8 + $0x20] sm:$0xff]
        %v417 = vld [vmem:[#allocation8 + $0x28] sm:$0xff]
        %v418 = vld [vmem:[#allocation8 + $0x30] sm:$0xff]
        %v419 = vld [vmem:[#allocation8 + $0x38] sm:$0xff]
        %v420 = vld [vmem:[#allocation8 + $0x40] sm:$0xff]
        %v421 = vld [vmem:[#allocation8 + $0x48] sm:$0xff]
        %v422 = vld [vmem:[#allocation8 + $0x50] sm:$0xff]
        %v423 = vld [vmem:[#allocation8 + $0x58] sm:$0xff]
        %v424 = vld [vmem:[#allocation8 + $0x60] sm:$0xff]
        %v425 = vld [vmem:[#allocation8 + $0x68] sm:$0xff]
        %v426 = vld [vmem:[#allocation8 + $0x70] sm:$0xff]
        %v427 = vld [vmem:[#allocation8 + $0x78] sm:$0xff]
        %428 = vmatpush.msra.mxu0 %v427
        %429 = vmatpush.msra.mxu0 %v426
        %430 = vmatpush.msra.mxu0 %v425
        %431 = vmatpush.msra.mxu0 %v424
        %432 = vmatpush.msra.mxu0 %v423
        %433 = vmatpush.msra.mxu0 %v422
        %434 = vmatpush.msra.mxu0 %v421
        %435 = vmatpush.msra.mxu0 %v420
        %436 = vmatpush.msra.mxu0 %v419
        %437 = vmatpush.msra.mxu0 %v418
        %438 = vmatpush.msra.mxu0 %v417
        %439 = vmatpush.msra.mxu0 %v416
        %440 = vmatpush.msra.mxu0 %v415
        %441 = vmatpush.msra.mxu0 %v414
        %442 = vmatpush.msra.mxu0 %v413
        %443 = vmatpush.msra.mxu0 %v412
        %444 = vmatmul.f32.gmra.mxu0 %v388
        %v445 = vpop.f32.mrf.mxu0
        %v446 = vadd.f32 0.0, %v445
        %447 = vmatmul.f32.gmra.mxu0 %v389
        %v448 = vpop.f32.mrf.mxu0
        %v449 = vadd.f32 0.0, %v448
        %450 = vmatmul.f32.gmra.mxu0 %v390
        %v451 = vpop.f32.mrf.mxu0
        %v452 = vadd.f32 0.0, %v451
        %453 = vmatmul.f32.gmra.mxu0 %v391
        %v454 = vpop.f32.mrf.mxu0
        %v455 = vadd.f32 0.0, %v454
        %456 = vmatmul.f32.gmra.mxu0 %v392
        %v457 = vpop.f32.mrf.mxu0
        %v458 = vadd.f32 0.0, %v457
        %459 = vmatmul.f32.gmra.mxu0 %v393
        %v460 = vpop.f32.mrf.mxu0
        %v461 = vadd.f32 0.0, %v460
        %462 = vmatmul.f32.gmra.mxu0 %v394
        %v463 = vpop.f32.mrf.mxu0
        %v464 = vadd.f32 0.0, %v463
        %465 = vmatmul.f32.gmra.mxu0 %v395
        %v466 = vpop.f32.mrf.mxu0
        %v467 = vadd.f32 0.0, %v466
        %468 = vdwg.mxu0
        %469 = vmatpush.msra.mxu0 %v411
        %470 = vmatpush.msra.mxu0 %v410
        %471 = vmatpush.msra.mxu0 %v409
        %472 = vmatpush.msra.mxu0 %v408
        %473 = vmatpush.msra.mxu0 %v407
        %474 = vmatpush.msra.mxu0 %v406
        %475 = vmatpush.msra.mxu0 %v405
        %476 = vmatpush.msra.mxu0 %v404
        %477 = vmatpush.msra.mxu0 %v403
        %478 = vmatpush.msra.mxu0 %v402
        %479 = vmatpush.msra.mxu0 %v401
        %480 = vmatpush.msra.mxu0 %v400
        %481 = vmatpush.msra.mxu0 %v399
        %482 = vmatpush.msra.mxu0 %v398
        %483 = vmatpush.msra.mxu0 %v397
        %484 = vmatpush.msra.mxu0 %v396
        %485 = vmatmul.f32.gmra.mxu0 %v380
        %v486 = vpop.f32.mrf.mxu0
        %v487 = vadd.f32 %v446, %v486
        %488 = vmatmul.f32.gmra.mxu0 %v381
        %v489 = vpop.f32.mrf.mxu0
        %v490 = vadd.f32 %v449, %v489
        %491 = vmatmul.f32.gmra.mxu0 %v382
        %v492 = vpop.f32.mrf.mxu0
        %v493 = vadd.f32 %v452, %v492
        %494 = vmatmul.f32.gmra.mxu0 %v383
        %v495 = vpop.f32.mrf.mxu0
        %v496 = vadd.f32 %v455, %v495
        %497 = vmatmul.f32.gmra.mxu0 %v384
        %v498 = vpop.f32.mrf.mxu0
        %v499 = vadd.f32 %v458, %v498
        %500 = vmatmul.f32.gmra.mxu0 %v385
        %v501 = vpop.f32.mrf.mxu0
        %v502 = vadd.f32 %v461, %v501
        %503 = vmatmul.f32.gmra.mxu0 %v386
        %v504 = vpop.f32.mrf.mxu0
        %v505 = vadd.f32 %v464, %v504
        %506 = vmatmul.f32.gmra.mxu0 %v387
        %v507 = vpop.f32.mrf.mxu0
        %v508 = vadd.f32 %v467, %v507
        %509 = vdwg.mxu0
        %v510 = vld [vmem:[%s4] sm:$0x1]
        %v512 = vperm.slane %v510, 0
        %v514 = vadd.f32 %v487, %v512
        %v515 = vadd.f32 %v490, %v512
        %v516 = vadd.f32 %v493, %v512
        %v517 = vadd.f32 %v496, %v512
        %v518 = vadd.f32 %v499, %v512
        %v519 = vadd.f32 %v502, %v512
        %v520 = vadd.f32 %v505, %v512
        %v521 = vadd.f32 %v508, %v512
        %522 = vadd.xlane.f32.xlu0 %v514
        %v523 = vpop.xlane.xlu0 %522
        %524 = vadd.xlane.f32.xlu0 %v515
        %v525 = vpop.xlane.xlu0 %524
        %526 = vadd.xlane.f32.xlu0 %v516
        %v527 = vpop.xlane.xlu0 %526
        %528 = vadd.xlane.f32.xlu0 %v517
        %v529 = vpop.xlane.xlu0 %528
        %530 = vadd.xlane.f32.xlu0 %v518
        %v531 = vpop.xlane.xlu0 %530
        %532 = vadd.xlane.f32.xlu0 %v519
        %v533 = vpop.xlane.xlu0 %532
        %534 = vadd.xlane.f32.xlu0 %v520
        %v535 = vpop.xlane.xlu0 %534
        %536 = vadd.xlane.f32.xlu0 %v521
        %v537 = vpop.xlane.xlu0 %536
        %v538 = vrcp.pop 128.0
        %v539 = vmul.f32 128.0, %v538
        %v540 = vsub.f32 1.0, %v539
        %v541 = vmul.f32 %v538, %v540
        %v542 = vadd.f32 %v538, %v541
        %vm543 = vweird.f32 %v538
        %v544 = vsel %vm543, %v538, %v542
        %v545 = vmul.f32 %v523, %v544
        %v546 = vmul.f32 %v525, %v544
        %v547 = vmul.f32 %v527, %v544
        %v548 = vmul.f32 %v529, %v544
        %v549 = vmul.f32 %v531, %v544
        %v550 = vmul.f32 %v533, %v544
        %v551 = vmul.f32 %v535, %v544
        %v552 = vmul.f32 %v537, %v544
        %v553 = vmul.f32 %v514, %v514
        %v554 = vmul.f32 %v515, %v515
        %v555 = vmul.f32 %v516, %v516
        %v556 = vmul.f32 %v517, %v517
        %v557 = vmul.f32 %v518, %v518
        %v558 = vmul.f32 %v519, %v519
        %v559 = vmul.f32 %v520, %v520
        %v560 = vmul.f32 %v521, %v521
        %561 = vadd.xlane.f32.xlu0 %v553
        %v562 = vpop.xlane.xlu0 %561
        %563 = vadd.xlane.f32.xlu0 %v554
        %v564 = vpop.xlane.xlu0 %563
        %565 = vadd.xlane.f32.xlu0 %v555
        %v566 = vpop.xlane.xlu0 %565
        %567 = vadd.xlane.f32.xlu0 %v556
        %v568 = vpop.xlane.xlu0 %567
        %569 = vadd.xlane.f32.xlu0 %v557
        %v570 = vpop.xlane.xlu0 %569
        %571 = vadd.xlane.f32.xlu0 %v558
        %v572 = vpop.xlane.xlu0 %571
        %573 = vadd.xlane.f32.xlu0 %v559
        %v574 = vpop.xlane.xlu0 %573
        %575 = vadd.xlane.f32.xlu0 %v560
        %v576 = vpop.xlane.xlu0 %575
        %v577 = vmul.f32 %v562, %v544
        %v578 = vmul.f32 %v564, %v544
        %v579 = vmul.f32 %v566, %v544
        %v580 = vmul.f32 %v568, %v544
        %v581 = vmul.f32 %v570, %v544
        %v582 = vmul.f32 %v572, %v544
        %v583 = vmul.f32 %v574, %v544
        %v584 = vmul.f32 %v576, %v544
        %v585 = vmul.f32 %v545, %v545
        %v586 = vmul.f32 %v546, %v546
        %v587 = vmul.f32 %v547, %v547
        %v588 = vmul.f32 %v548, %v548
        %v589 = vmul.f32 %v549, %v549
        %v590 = vmul.f32 %v550, %v550
        %v591 = vmul.f32 %v551, %v551
        %v592 = vmul.f32 %v552, %v552
        %v593 = vsub.f32 %v577, %v585
        %v594 = vsub.f32 %v578, %v586
        %v595 = vsub.f32 %v579, %v587
        %v596 = vsub.f32 %v580, %v588
        %v597 = vsub.f32 %v581, %v589
        %v598 = vsub.f32 %v582, %v590
        %v599 = vsub.f32 %v583, %v591
        %v600 = vsub.f32 %v584, %v592
        %v601 = vmax.f32 %v593, 0.0
        %v602 = vmax.f32 %v594, 0.0
        %v603 = vmax.f32 %v595, 0.0
        %v604 = vmax.f32 %v596, 0.0
        %v605 = vmax.f32 %v597, 0.0
        %v606 = vmax.f32 %v598, 0.0
        %v607 = vmax.f32 %v599, 0.0
        %v608 = vmax.f32 %v600, 0.0
        %v609 = vsub.f32 %v514, %v545
        %v610 = vsub.f32 %v515, %v546
        %v611 = vsub.f32 %v516, %v547
        %v612 = vsub.f32 %v517, %v548
        %v613 = vsub.f32 %v518, %v549
        %v614 = vsub.f32 %v519, %v550
        %v615 = vsub.f32 %v520, %v551
        %v616 = vsub.f32 %v521, %v552
        %v617 = vadd.f32 %v601, 1e-05
        %v618 = vadd.f32 %v602, 1e-05
        %v619 = vadd.f32 %v603, 1e-05
        %v620 = vadd.f32 %v604, 1e-05
        %v621 = vadd.f32 %v605, 1e-05
        %v622 = vadd.f32 %v606, 1e-05
        %v623 = vadd.f32 %v607, 1e-05
        %v624 = vadd.f32 %v608, 1e-05
        %v625 = vrsqrt.pop %v617
        %v626 = vmul.f32 %v625, %v617
        %v627 = vmul.f32 %v626, %v625
        %v628 = vmul.f32 0.5, %v627
        %v629 = vsub.f32 1.5, %v628
        %v630 = vmul.f32 %v625, %v629
        %vm631 = vweird.f32 %v617
        %vm632 = vweird.f32 %v625
        %vm633 = vmor %vm631, %vm632
        %v634 = vsel %vm633, %v625, %v630
        %v635 = vrsqrt.pop %v618
        %v636 = vmul.f32 %v635, %v618
        %v637 = vmul.f32 %v636, %v635
        %v638 = vmul.f32 0.5, %v637
        %v639 = vsub.f32 1.5, %v638
        %v640 = vmul.f32 %v635, %v639
        %vm641 = vweird.f32 %v618
        %vm642 = vweird.f32 %v635
        %vm643 = vmor %vm641, %vm642
        %v644 = vsel %vm643, %v635, %v640
        %v645 = vrsqrt.pop %v619
        %v646 = vmul.f32 %v645, %v619
        %v647 = vmul.f32 %v646, %v645
        %v648 = vmul.f32 0.5, %v647
        %v649 = vsub.f32 1.5, %v648
        %v650 = vmul.f32 %v645, %v649
        %vm651 = vweird.f32 %v619
        %vm652 = vweird.f32 %v645
        %vm653 = vmor %vm651, %vm652
        %v654 = vsel %vm653, %v645, %v650
        %v655 = vrsqrt.pop %v620
        %v656 = vmul.f32 %v655, %v620
        %v657 = vmul.f32 %v656, %v655
        %v658 = vmul.f32 0.5, %v657
        %v659 = vsub.f32 1.5, %v658
        %v660 = vmul.f32 %v655, %v659
        %vm661 = vweird.f32 %v620
        %vm662 = vweird.f32 %v655
        %vm663 = vmor %vm661, %vm662
        %v664 = vsel %vm663, %v655, %v660
        %v665 = vrsqrt.pop %v621
        %v666 = vmul.f32 %v665, %v621
        %v667 = vmul.f32 %v666, %v665
        %v668 = vmul.f32 0.5, %v667
        %v669 = vsub.f32 1.5, %v668
        %v670 = vmul.f32 %v665, %v669
        %vm671 = vweird.f32 %v621
        %vm672 = vweird.f32 %v665
        %vm673 = vmor %vm671, %vm672
        %v674 = vsel %vm673, %v665, %v670
        %v675 = vrsqrt.pop %v622
        %v676 = vmul.f32 %v675, %v622
        %v677 = vmul.f32 %v676, %v675
        %v678 = vmul.f32 0.5, %v677
        %v679 = vsub.f32 1.5, %v678
        %v680 = vmul.f32 %v675, %v679
        %vm681 = vweird.f32 %v622
        %vm682 = vweird.f32 %v675
        %vm683 = vmor %vm681, %vm682
        %v684 = vsel %vm683, %v675, %v680
        %v685 = vrsqrt.pop %v623
        %v686 = vmul.f32 %v685, %v623
        %v687 = vmul.f32 %v686, %v685
        %v688 = vmul.f32 0.5, %v687
        %v689 = vsub.f32 1.5, %v688
        %v690 = vmul.f32 %v685, %v689
        %vm691 = vweird.f32 %v623
        %vm692 = vweird.f32 %v685
        %vm693 = vmor %vm691, %vm692
        %v694 = vsel %vm693, %v685, %v690
        %v695 = vrsqrt.pop %v624
        %v696 = vmul.f32 %v695, %v624
        %v697 = vmul.f32 %v696, %v695
        %v698 = vmul.f32 0.5, %v697
        %v699 = vsub.f32 1.5, %v698
        %v700 = vmul.f32 %v695, %v699
        %vm701 = vweird.f32 %v624
        %vm702 = vweird.f32 %v695
        %vm703 = vmor %vm701, %vm702
        %v704 = vsel %vm703, %v695, %v700
        %v705 = vmul.f32 %v609, %v634
        %v706 = vmul.f32 %v610, %v644
        %v707 = vmul.f32 %v611, %v654
        %v708 = vmul.f32 %v612, %v664
        %v709 = vmul.f32 %v613, %v674
        %v710 = vmul.f32 %v614, %v684
        %v711 = vmul.f32 %v615, %v694
        %v712 = vmul.f32 %v616, %v704
        %v713 = vld [vmem:[%s5] sm:$0x1]
        %v715 = vperm.slane %v713, 0
        %v717 = vmul.f32 %v705, %v715
        %v718 = vmul.f32 %v706, %v715
        %v719 = vmul.f32 %v707, %v715
        %v720 = vmul.f32 %v708, %v715
        %v721 = vmul.f32 %v709, %v715
        %v722 = vmul.f32 %v710, %v715
        %v723 = vmul.f32 %v711, %v715
        %v724 = vmul.f32 %v712, %v715
        %v725 = vld [vmem:[%s6] sm:$0x1]
        %v727 = vperm.slane %v725, 0
        %v729 = vadd.f32 %v717, %v727
        %v730 = vadd.f32 %v718, %v727
        %v731 = vadd.f32 %v719, %v727
        %v732 = vadd.f32 %v720, %v727
        %v733 = vadd.f32 %v721, %v727
        %v734 = vadd.f32 %v722, %v727
        %v735 = vadd.f32 %v723, %v727
        %v736 = vadd.f32 %v724, %v727
        %737 = vst [vmem:[%s376] sm:$0xff] %v729
        %738 = vst [vmem:[%s376 + $0x8] sm:$0xff] %v730
        %739 = vst [vmem:[%s376 + $0x10] sm:$0xff] %v731
        %740 = vst [vmem:[%s376 + $0x18] sm:$0xff] %v732
        %741 = vst [vmem:[%s376 + $0x20] sm:$0xff] %v733
        %742 = vst [vmem:[%s376 + $0x28] sm:$0xff] %v734
        %743 = vst [vmem:[%s376 + $0x30] sm:$0xff] %v735
        %744 = vst [vmem:[%s376 + $0x38] sm:$0xff] %v736
        %s745 = sand.u32 %s193, 1
        %s746 = scalar_lea.sflag [#allocation4], %s745
        %s747 = sand.u32 %s193, 1
        %s748 = smul.addr %s747, 64
        %s749 = scalar_lea.vmem [#allocation10], %s748
        // Predicated region
        $region65: #{tpu_custom_call.1} parent=47 // pred_check
          %p750 = pneg %p203
        $region66: #{tpu_custom_call.1} parent=47 // pred_check_branch
          %752 = sbr.rel (%p750) target = $region68
        $region67: #{tpu_custom_call.1} parent=47 // pred_region
          %s753 = smul.u32 8, %s28
          %755 = vsyncadd %s746, 0
          %s756 = smul.addr %s753, 8
          %s757 = scalar_lea.hbm %s7, %s756
          %s758 = sshll.u32 %s749, 4
          %s759 = int_to_ptr.vmem [resolvable:$true] %s758
          %s760 = sshll.u32 %s757, 4
          %s761 = int_to_ptr.hbm [resolvable:$true] %s760
          %766 = dma.vmem_to_hbm [thread:$0]  %s759, 1024, %s761, %s746, 128, 128, 8
        $region68: #{tpu_custom_call.1} parent=47 // pred_fallthru
          _
      $region48: #{tpu_custom_call.1} parent=5 // pred_fallthru
        _
      %p767 = scmp.le.s32.totalorder 2, %s23
      // Predicated region
      $region69: #{tpu_custom_call.1} parent=5 // pred_check
        %p768 = pneg %p767
      $region70: #{tpu_custom_call.1} parent=5 // pred_check_branch
        %770 = sbr.rel (%p768) target = $region72
      $region71: #{tpu_custom_call.1} parent=5 // pred_region
        %s771 = ssub.s32 %s23, 2
        // Predicated region
        $region73: #{tpu_custom_call.1} parent=71 // pred_check
          %p772 = pneg %p209
        $region74: #{tpu_custom_call.1} parent=71 // pred_check_branch
          %774 = sbr.rel (%p772) target = $region76
        $region75: #{tpu_custom_call.1} parent=71 // pred_region
          %s775 = sand.u32 %s194, 1
          %s776 = scalar_lea.sflag [#allocation4], %s775
          %s777 = sand.u32 %s194, 1
          %s778 = smul.addr %s777, 64
          %s779 = scalar_lea.vmem [#allocation10], %s778
          %781 = dma.done %s776, 1024
        $region76: #{tpu_custom_call.1} parent=71 // pred_fallthru
          _
      $region72: #{tpu_custom_call.1} parent=5 // pred_fallthru
        _
    $region6: #{tpu_custom_call.1} parent=1 // loop_footer
      %s27 = sadd.s32 1, %s23
    $region7: #{tpu_custom_call.1} parent=1 // loop_footer_branch
      %22 = sbr.rel target = $region3
    $region8: #{tpu_custom_call.1} parent=1 // loop_exit
      _
    %782 = vsyncpa [#allocation3], 1
    %s783 = scalar_lea.sflag [#allocation3], 1
    %784 = vsyncpa %s783, 1
    %785 = vsyncpa [#allocation6], 1
    %s786 = scalar_lea.sflag [#allocation6], 1
    %787 = vsyncpa %s786, 1
    %788 = vsyncpa [#allocation9], 1
    %789 = vsyncpa [#allocation4], 1
    %s790 = scalar_lea.sflag [#allocation4], 1
    %791 = vsyncpa %s790, 1

</llo_original>
